<compile_context>
chip_gen: v5e
topology: v5e:2x2
jax: 0.10.0
libtpu: 0.0.40
codegen_flags: <defaults>
</compile_context>

<pallas_src>
import jax
import jax.numpy as jnp
from jax.experimental import pallas as pl
from jax.experimental.pallas import tpu as pltpu


def _self_attention_kernel(x_ref, w1_ref, w2_ref, fcw_ref, fcb_ref, o_ref):
    TB, S, two_h = x_ref.shape

    x3 = x_ref[...]                                   # (TB, S, 2H) hidden states
    x2 = x3.reshape(TB * S, two_h)                    # flatten batch*seq (layout no-op)

    # Two fused projections as single MXU matmuls over the flattened rows.
    act = jnp.tanh(jnp.dot(x2, w1_ref[...], preferred_element_type=jnp.float32))   # (TB*S, E)
    scores = jnp.dot(act, w2_ref[...], preferred_element_type=jnp.float32)         # (TB*S, A)

    # Softmax over the attention-layer axis fused with the Linear(A -> 1)
    # contraction: coef[r] = (exp(scores[r]) @ fc_w) / sum(exp(scores[r])).
    m = jnp.max(scores, axis=-1, keepdims=True)
    e = jnp.exp(scores - m)                                                          # (TB*S, A)
    num = jnp.sum(e * fcw_ref[...], axis=-1, keepdims=True)                          # (TB*S, 1)
    den = jnp.sum(e, axis=-1, keepdims=True)                                         # (TB*S, 1)
    coef = num / den                                                                 # (TB*S, 1)

    # Attentional vector: per-batch weighted sum over the sequence (pure VPU,
    # no bmm / transpose).
    z = coef * x2                                                                    # (TB*S, 2H)
    av = jnp.sum(z.reshape(TB, S, two_h), axis=1)                                    # (TB, 2H)

    # fc bias (scalar from SMEM) + LeakyReLU (default negative_slope = 0.01).
    y = av + fcb_ref[0, 0]
    o_ref[...] = jnp.where(y >= 0, y, 0.01 * y).astype(o_ref.dtype)


def self_attention(x, params, *, block_b=None):
    B, S, two_h = x.shape
    E = params['w1'].shape[1]
    A = params['w2'].shape[1]

    if block_b is None:
        block_b = B if B <= 8 else 8
    assert B % block_b == 0, "batch must be divisible by the batch tile"
    grid = (B // block_b,)

    return pl.pallas_call(
        _self_attention_kernel,
        out_shape=jax.ShapeDtypeStruct((B, two_h), jnp.float32),
        grid_spec=pltpu.PrefetchScalarGridSpec(
            num_scalar_prefetch=0,
            grid=grid,
            in_specs=[
                pl.BlockSpec((block_b, S, two_h), lambda i: (i, 0, 0)),   # x batch tile
                pl.BlockSpec((two_h, E), lambda i: (0, 0)),               # W1 (resident)
                pl.BlockSpec((E, A), lambda i: (0, 0)),                   # W2 (resident)
                pl.BlockSpec((1, A), lambda i: (0, 0)),                   # fc weight row
                pl.BlockSpec(memory_space=pltpu.MemorySpace.SMEM),        # fc bias scalar
            ],
            out_specs=pl.BlockSpec((block_b, two_h), lambda i: (i, 0)),
        ),
        compiler_params=pltpu.CompilerParams(
            dimension_semantics=("parallel",),
        ),
    )(x, params['w1'], params['w2'], params['fc_w'], params['fc_b'])


def reference(x, params):
    """Plain-JAX replica of the PyTorch forward, for verification."""
    H = x.shape[-1] // 2
    hs = jnp.concatenate([x[..., :H], x[..., H:]], axis=-1)   # extract_hidden_states (identity)
    ws = hs @ params['w1']                                    # (B, S, E)
    act = jnp.tanh(ws)
    sc = act @ params['w2']                                   # (B, S, A)
    attn = jax.nn.softmax(sc, axis=2)
    av = jnp.einsum('bsa,bsh->bah', attn, hs)                 # bmm(attn^T, hs): (B, A, 2H)
    av = jnp.transpose(av, (0, 2, 1))                         # (B, 2H, A)
    out = av @ params['fc_w'][0] + params['fc_b'][0, 0]       # Linear(A -> 1), squeeze
    return jax.nn.leaky_relu(out, negative_slope=0.01)


def build_params(key, hidden, expansion, attention):
    """Deterministic stand-in for SelfAttention.build() (weights stored pre-transposed)."""
    ks = jax.random.split(key, 4)
    two_h = 2 * hidden

    def uni(k, shape, fan_in):
        b = 1.0 / jnp.sqrt(jnp.float32(fan_in))
        return jax.random.uniform(k, shape, jnp.float32, -b, b)

    return {
        'w1': uni(ks[0], (two_h, expansion), two_h),        # Linear(2H, E, bias=False)^T
        'w2': uni(ks[1], (expansion, attention), expansion),  # Linear(E, A, bias=False)^T
        'fc_w': uni(ks[2], (1, attention), attention),      # Linear(A, 1).weight
        'fc_b': uni(ks[3], (1, 1), attention),              # Linear(A, 1).bias
    }


if __name__ == "__main__":
    # hidden_size=64 -> 2H=128 (lane-dense output), small expansion/attention dims.
    B, S, H, E, A = 16, 8, 64, 128, 128
    key = jax.random.PRNGKey(0)
    k_x, k_p = jax.random.split(key)

    x = jax.random.normal(k_x, (B, S, 2 * H), jnp.float32)
    params = build_params(k_p, hidden=H, expansion=E, attention=A)

    out = self_attention(x, params)
    out = jax.block_until_ready(out)

    ref = reference(x, params)
    assert out.shape == (B, 2 * H)
    assert jnp.allclose(out, ref, atol=1e-4, rtol=1e-4), "mismatch vs reference"

    print("KERNEL_OK")
</pallas_src>

<mosaic_0001>
module attributes {stable_mosaic.version = 11 : i64} {
  func.func @_self_attention_kernel(%arg0: i32, %arg1: memref<8x8x128xf32, #tpu.memory_space<vmem>>, %arg2: memref<128x128xf32, #tpu.memory_space<vmem>>, %arg3: memref<128x128xf32, #tpu.memory_space<vmem>>, %arg4: memref<1x128xf32, #tpu.memory_space<vmem>>, %arg5: memref<1x1xf32, #tpu.memory_space<smem>>, %arg6: memref<8x128xf32, #tpu.memory_space<vmem>>) attributes {dimension_semantics = [#tpu.dimension_semantics<parallel>], iteration_bounds = array<i64: 2>, scalar_prefetch = 0 : i64, scratch_operands = 0 : i64, tpu.core_type = #tpu.core_type<tc>, window_params = [{transform_indices = @transform_0, window_bounds = array<i64: 8, 8, 128>}, {pipeline_mode = #tpu.pipeline_mode<synchronous>, transform_indices = @transform_1, window_bounds = array<i64: 128, 128>}, {pipeline_mode = #tpu.pipeline_mode<synchronous>, transform_indices = @transform_2, window_bounds = array<i64: 128, 128>}, {pipeline_mode = #tpu.pipeline_mode<synchronous>, transform_indices = @transform_3, window_bounds = array<i64: 1, 128>}, {transform_indices = @transform_4, window_bounds = array<i64: 1, 1>}, {transform_indices = @transform_5, window_bounds = array<i64: 8, 128>}]} {
    %c0 = arith.constant 0 : index
    %c0_0 = arith.constant 0 : index
    %c0_1 = arith.constant 0 : index
    %0 = vector.load %arg1[%c0, %c0_0, %c0_1] : memref<8x8x128xf32, #tpu.memory_space<vmem>>, vector<8x8x128xf32>
    %1 = vector.shape_cast %0 : vector<8x8x128xf32> to vector<64x128xf32>
    %c0_2 = arith.constant 0 : index
    %c0_3 = arith.constant 0 : index
    %2 = vector.load %arg2[%c0_2, %c0_3] : memref<128x128xf32, #tpu.memory_space<vmem>>, vector<128x128xf32>
    %cst = arith.constant dense<0.000000e+00> : vector<64x128xf32>
    %3 = tpu.matmul %1, %2, %cst {dimension_numbers = #tpu.dot_dimension_numbers<[1], [0], [0], [1], [0, 0, 1, 1], [], []>} : vector<64x128xf32>, vector<128x128xf32>, vector<64x128xf32> -> vector<64x128xf32>
    %4 = math.tanh %3 : vector<64x128xf32>
    %c0_4 = arith.constant 0 : index
    %c0_5 = arith.constant 0 : index
    %5 = vector.load %arg3[%c0_4, %c0_5] : memref<128x128xf32, #tpu.memory_space<vmem>>, vector<128x128xf32>
    %cst_6 = arith.constant dense<0.000000e+00> : vector<64x128xf32>
    %6 = tpu.matmul %4, %5, %cst_6 {dimension_numbers = #tpu.dot_dimension_numbers<[1], [0], [0], [1], [0, 0, 1, 1], [], []>} : vector<64x128xf32>, vector<128x128xf32>, vector<64x128xf32> -> vector<64x128xf32>
    %cst_7 = arith.constant dense<0xFF800000> : vector<64xf32>
    %7 = vector.multi_reduction <maximumf>, %6, %cst_7 [1] : vector<64x128xf32> to vector<64xf32>
    %8 = vector.shape_cast %7 : vector<64xf32> to vector<64x1xf32>
    %9 = vector.broadcast %8 : vector<64x1xf32> to vector<64x128xf32>
    %10 = arith.subf %6, %9 : vector<64x128xf32>
    %11 = math.exp %10 : vector<64x128xf32>
    %c0_8 = arith.constant 0 : index
    %c0_9 = arith.constant 0 : index
    %12 = vector.load %arg4[%c0_8, %c0_9] : memref<1x128xf32, #tpu.memory_space<vmem>>, vector<1x128xf32>
    %13 = vector.broadcast %12 : vector<1x128xf32> to vector<64x128xf32>
    %14 = arith.mulf %11, %13 : vector<64x128xf32>
    %cst_10 = arith.constant dense<0.000000e+00> : vector<64xf32>
    %15 = vector.multi_reduction <add>, %14, %cst_10 [1] : vector<64x128xf32> to vector<64xf32>
    %16 = vector.shape_cast %15 : vector<64xf32> to vector<64x1xf32>
    %cst_11 = arith.constant dense<0.000000e+00> : vector<64xf32>
    %17 = vector.multi_reduction <add>, %11, %cst_11 [1] : vector<64x128xf32> to vector<64xf32>
    %18 = vector.shape_cast %17 : vector<64xf32> to vector<64x1xf32>
    %19 = arith.divf %16, %18 : vector<64x1xf32>
    %20 = vector.broadcast %19 : vector<64x1xf32> to vector<64x128xf32>
    %21 = arith.mulf %20, %1 : vector<64x128xf32>
    %22 = vector.shape_cast %21 : vector<64x128xf32> to vector<8x8x128xf32>
    %cst_12 = arith.constant dense<0.000000e+00> : vector<8x128xf32>
    %23 = vector.multi_reduction <add>, %22, %cst_12 [1] : vector<8x8x128xf32> to vector<8x128xf32>
    %c0_13 = arith.constant 0 : index
    %c0_14 = arith.constant 0 : index
    %24 = memref.load %arg5[%c0_13, %c0_14] : memref<1x1xf32, #tpu.memory_space<smem>>
    %25 = vector.broadcast %24 : f32 to vector<8x128xf32>
    %26 = arith.addf %23, %25 : vector<8x128xf32>
    %cst_15 = arith.constant 0.000000e+00 : f32
    %27 = vector.broadcast %cst_15 : f32 to vector<8x128xf32>
    %28 = arith.cmpf oge, %26, %27 : vector<8x128xf32>
    %cst_16 = arith.constant 0.00999999977 : f32
    %29 = vector.broadcast %cst_16 : f32 to vector<8x128xf32>
    %30 = arith.mulf %29, %26 : vector<8x128xf32>
    %31 = arith.select %28, %26, %30 : vector<8x128xi1>, vector<8x128xf32>
    %c0_17 = arith.constant 0 : index
    %c0_18 = arith.constant 0 : index
    %32 = vector.load %arg6[%c0_17, %c0_18] : memref<8x128xf32, #tpu.memory_space<vmem>>, vector<8x128xf32>
    tpu.vector_store %arg6[%c0_17, %c0_18], %31 {strides = array<i32>} : memref<8x128xf32, #tpu.memory_space<vmem>>, vector<8x128xf32>,
    return
  }
  func.func @transform_0(%arg0: i32) -> (i32, i32, i32) {
    %c0_i32 = arith.constant 0 : i32
    %c0_i32_0 = arith.constant 0 : i32
    %c0_i32_1 = arith.constant 0 : i32
    return %arg0, %c0_i32, %c0_i32_0 : i32, i32, i32
  }
  func.func @transform_1(%arg0: i32) -> (i32, i32) {
    %c0_i32 = arith.constant 0 : i32
    %c0_i32_0 = arith.constant 0 : i32
    %c0_i32_1 = arith.constant 0 : i32
    return %c0_i32, %c0_i32_0 : i32, i32
  }
  func.func @transform_2(%arg0: i32) -> (i32, i32) {
    %c0_i32 = arith.constant 0 : i32
    %c0_i32_0 = arith.constant 0 : i32
    %c0_i32_1 = arith.constant 0 : i32
    return %c0_i32, %c0_i32_0 : i32, i32
  }
  func.func @transform_3(%arg0: i32) -> (i32, i32) {
    %c0_i32 = arith.constant 0 : i32
    %c0_i32_0 = arith.constant 0 : i32
    %c0_i32_1 = arith.constant 0 : i32
    return %c0_i32, %c0_i32_0 : i32, i32
  }
  func.func @transform_4(%arg0: i32) -> (i32, i32) {
    %c0_i32 = arith.constant 0 : i32
    %c0_i32_0 = arith.constant 0 : i32
    %c0_i32_1 = arith.constant 0 : i32
    return %c0_i32, %c0_i32_0 : i32, i32
  }
  func.func @transform_5(%arg0: i32) -> (i32, i32) {
    %c0_i32 = arith.constant 0 : i32
    %c0_i32_0 = arith.constant 0 : i32
    return %arg0, %c0_i32 : i32, i32
  }
}

</mosaic_0001>

<llo_original>
// kernel: tpu_custom_call.1
$region0: #{tpu_custom_call.1}
  #allocation0 [shape = 'u32[]', space=smem, size = 0x4, offset = 0x4, fixed_abs, tag = 'smem constant byte address 0x4 - core index']
  #allocation1 [shape = 'u32[72,128]{1,0:T(1,128)}', space=vmem, size = 0x9000, scoped, tag = 'internal scratch']
  #allocation2 [shape = 'f32[1,1]{1,0:T(1,128)S(6)}', space=smem, size = 0x200, scoped, tag = 'scoped memory for tpu_custom_call.1']
  %s0 = inlined_call_operand.hbm [shape: f32[16,8,128], index: 0, kind: input, shape index: {}]
  %s1 = inlined_call_operand.hbm [shape: f32[128,128], index: 1, kind: input, shape index: {}]
  %s2 = inlined_call_operand.hbm [shape: f32[128,128], index: 2, kind: input, shape index: {}]
  %s3 = inlined_call_operand.vmem [shape: f32[1,128], index: 3, kind: input, shape index: {}]
  %s4 = inlined_call_operand.<no memory space> [shape: f32[1,1], index: 4, kind: input, shape index: {}]
  %s5 = inlined_call_operand.hbm [shape: f32[16,128], index: 5, kind: output, shape index: {}]
  %s6 = sld [smem:[#allocation0]]
  $region65: #{tpu_custom_call.1} parent=0
    _
  %s8 = ssub.s32 1, %s6
  %s9 = scalar_select 0, %s8, %s6
  %10 = sst [smem:[#allocation2]] %s4
  $region1: #{tpu_custom_call.1} parent=0
    #allocation3 [shape = 'u8[65536]{0}', space=vmem, size = 0x10000, scoped, tag = 'input window, operand 0']
    #allocation4 [shape = 's32[2]{0}', space=sflag, size = 0x8, scoped, tag = 'scoped memory for tpu_custom_call.1']
    #allocation5 [shape = 's32[2]{0}', space=sflag, size = 0x8, scoped, tag = 'scoped memory for tpu_custom_call.1']
    #allocation6 [shape = 'u8[65536]{0}', space=vmem, size = 0x10000, scoped, tag = 'input window, operand 1, single buffered']
    #allocation7 [shape = 's32[1]{0}', space=sflag, size = 0x4, scoped, tag = 'scoped memory for tpu_custom_call.1']
    #allocation8 [shape = 'u8[65536]{0}', space=vmem, size = 0x10000, scoped, tag = 'input window, operand 2, single buffered']
    #allocation9 [shape = 'u8[8192]{0}', space=vmem, size = 0x2000, scoped, tag = 'output window, operand 0']
    %11 = vsyncpa [#allocation4], 0
    %s12 = scalar_lea.sflag [#allocation4], 1
    %13 = vsyncpa %s12, 0
    %14 = vsyncpa [#allocation7], 0
    %15 = vsyncpa [#allocation5], 0
    %s16 = scalar_lea.sflag [#allocation5], 1
    %17 = vsyncpa %s16, 0
    loop: start=0, step=1, limit=4
    $region2: #{tpu_custom_call.1} parent=1 // loop_pre_header
      _
    $region3: #{tpu_custom_call.1} parent=1 // loop_header
      %s19 = sphi 0, %s23
      %p20 = scmp.ge.s32.totalorder %s19, 4
      %s29 = sphi 0, %s31
      %s32 = sphi 0, %s29
      %s33 = sphi 0, %s32
      %s49 = sphi 0, %s33
      %s53 = sphi 0, %s53
      %s55 = sphi 0, %s53
      %s56 = sphi 0, %s55
      %s70 = sphi 0, %s56
      %s74 = sphi 0, %s74
      %s76 = sphi 0, %s74
      %s77 = sphi 0, %s76
      %s91 = sphi 0, %s77
      %s95 = sphi 0, %s95
      %s97 = sphi 0, %s95
      %s98 = sphi 0, %s97
      %s112 = sphi 0, %s98
      %s116 = sphi 0, %s116
      %s118 = sphi 0, %s116
      %s119 = sphi 0, %s118
      %s133 = sphi 0, %s119
      %s139 = sphi 0, %s141
      %s142 = sphi 0, %s139
      %s143 = sphi 0, %s142
      %s159 = sphi 0, %s143
    $region4: #{tpu_custom_call.1} parent=1 // loop_header_branch
      %22 = sbr.rel (%p20) target = $region8
    $region5: #{tpu_custom_call.1} parent=1 // loop_body
      %s24 = ssub.s32 %s19, 1
      %s25 = ssub.s32 %s19, 2
      %s26 = sadd.s32 %s19, 1
      %s27 = ssub.s32 %s19, %s26
      %p28 = scmp.eq.s32.totalorder %s27, 0
      %s30 = sadd.s32 %s29, 1
      %s31 = scalar_select %p28, %s29, %s30
      %p34 = pneg %p28
      %p35 = scmp.eq.s32.totalorder %s19, 1
      %p36 = por %p34, %p35
      %p37 = scmp.ne.s32.totalorder %s29, %s32
      %p38 = scmp.eq.s32.totalorder %s19, 0
      %p39 = por %p37, %p38
      %p40 = scmp.ne.s32.totalorder %s29, %s32
      %p41 = scmp.eq.s32.totalorder %s24, 1
      %p42 = por %p40, %p41
      %p43 = scmp.ne.s32.totalorder %s32, %s33
      %p44 = scmp.eq.s32.totalorder %s24, 0
      %p45 = por %p43, %p44
      %p46 = scmp.ne.s32.totalorder %s32, %s33
      %p47 = scmp.eq.s32.totalorder %s25, 1
      %p48 = por %p46, %p47
      %p50 = scmp.ne.s32.totalorder %s33, %s49
      %p51 = scmp.eq.s32.totalorder %s25, 0
      %p52 = por %p50, %p51
      %s54 = sadd.s32 %s53, 1
      %p57 = scmp.eq.s32.totalorder %s19, 1
      %p58 = scmp.ne.s32.totalorder %s53, %s55
      %p59 = scmp.eq.s32.totalorder %s19, 0
      %p60 = por %p58, %p59
      %p61 = scmp.ne.s32.totalorder %s53, %s55
      %p62 = scmp.eq.s32.totalorder %s24, 1
      %p63 = por %p61, %p62
      %p64 = scmp.ne.s32.totalorder %s55, %s56
      %p65 = scmp.eq.s32.totalorder %s24, 0
      %p66 = por %p64, %p65
      %p67 = scmp.ne.s32.totalorder %s55, %s56
      %p68 = scmp.eq.s32.totalorder %s25, 1
      %p69 = por %p67, %p68
      %p71 = scmp.ne.s32.totalorder %s56, %s70
      %p72 = scmp.eq.s32.totalorder %s25, 0
      %p73 = por %p71, %p72
      %s75 = sadd.s32 %s74, 1
      %p78 = scmp.eq.s32.totalorder %s19, 1
      %p79 = scmp.ne.s32.totalorder %s74, %s76
      %p80 = scmp.eq.s32.totalorder %s19, 0
      %p81 = por %p79, %p80
      %p82 = scmp.ne.s32.totalorder %s74, %s76
      %p83 = scmp.eq.s32.totalorder %s24, 1
      %p84 = por %p82, %p83
      %p85 = scmp.ne.s32.totalorder %s76, %s77
      %p86 = scmp.eq.s32.totalorder %s24, 0
      %p87 = por %p85, %p86
      %p88 = scmp.ne.s32.totalorder %s76, %s77
      %p89 = scmp.eq.s32.totalorder %s25, 1
      %p90 = por %p88, %p89
      %p92 = scmp.ne.s32.totalorder %s77, %s91
      %p93 = scmp.eq.s32.totalorder %s25, 0
      %p94 = por %p92, %p93
      %s96 = sadd.s32 %s95, 1
      %p99 = scmp.eq.s32.totalorder %s19, 1
      %p100 = scmp.ne.s32.totalorder %s95, %s97
      %p101 = scmp.eq.s32.totalorder %s19, 0
      %p102 = por %p100, %p101
      %p103 = scmp.ne.s32.totalorder %s95, %s97
      %p104 = scmp.eq.s32.totalorder %s24, 1
      %p105 = por %p103, %p104
      %p106 = scmp.ne.s32.totalorder %s97, %s98
      %p107 = scmp.eq.s32.totalorder %s24, 0
      %p108 = por %p106, %p107
      %p109 = scmp.ne.s32.totalorder %s97, %s98
      %p110 = scmp.eq.s32.totalorder %s25, 1
      %p111 = por %p109, %p110
      %p113 = scmp.ne.s32.totalorder %s98, %s112
      %p114 = scmp.eq.s32.totalorder %s25, 0
      %p115 = por %p113, %p114
      %s117 = sadd.s32 %s116, 1
      %p120 = scmp.eq.s32.totalorder %s19, 1
      %p121 = scmp.ne.s32.totalorder %s116, %s118
      %p122 = scmp.eq.s32.totalorder %s19, 0
      %p123 = por %p121, %p122
      %p124 = scmp.ne.s32.totalorder %s116, %s118
      %p125 = scmp.eq.s32.totalorder %s24, 1
      %p126 = por %p124, %p125
      %p127 = scmp.ne.s32.totalorder %s118, %s119
      %p128 = scmp.eq.s32.totalorder %s24, 0
      %p129 = por %p127, %p128
      %p130 = scmp.ne.s32.totalorder %s118, %s119
      %p131 = scmp.eq.s32.totalorder %s25, 1
      %p132 = por %p130, %p131
      %p134 = scmp.ne.s32.totalorder %s119, %s133
      %p135 = scmp.eq.s32.totalorder %s25, 0
      %p136 = por %p134, %p135
      %s137 = ssub.s32 %s19, %s26
      %p138 = scmp.eq.s32.totalorder %s137, 0
      %s140 = sadd.s32 %s139, 1
      %s141 = scalar_select %p138, %s139, %s140
      %p144 = pneg %p138
      %p145 = scmp.eq.s32.totalorder %s19, 1
      %p146 = por %p144, %p145
      %p147 = scmp.ne.s32.totalorder %s139, %s142
      %p148 = scmp.eq.s32.totalorder %s19, 0
      %p149 = por %p147, %p148
      %p150 = scmp.ne.s32.totalorder %s139, %s142
      %p151 = scmp.eq.s32.totalorder %s24, 1
      %p152 = por %p150, %p151
      %p153 = scmp.ne.s32.totalorder %s142, %s143
      %p154 = scmp.eq.s32.totalorder %s24, 0
      %p155 = por %p153, %p154
      %p156 = scmp.ne.s32.totalorder %s142, %s143
      %p157 = scmp.eq.s32.totalorder %s25, 1
      %p158 = por %p156, %p157
      %p160 = scmp.ne.s32.totalorder %s143, %s159
      %p161 = scmp.eq.s32.totalorder %s25, 0
      %p162 = por %p160, %p161
      %p163 = scmp.le.s32.totalorder 1, %s19
      %p164 = scmp.lt.s32.totalorder %s19, 3
      %p165 = pnand %p163, %p164
      %p166 = pneg %p165
      // Predicated region
      $region9: #{tpu_custom_call.1} parent=5 // pred_check
        _
      $region10: #{tpu_custom_call.1} parent=5 // pred_check_branch
        %168 = sbr.rel (%p165) target = $region12
      $region11: #{tpu_custom_call.1} parent=5 // pred_region
        %s169 = ssub.s32 %s19, 1
        // Predicated region
        $region13: #{tpu_custom_call.1} parent=11 // pred_check
          %p170 = pneg %p66
        $region14: #{tpu_custom_call.1} parent=11 // pred_check_branch
          %172 = sbr.rel (%p170) target = $region16
        $region15: #{tpu_custom_call.1} parent=11 // pred_region
          %174 = vsyncadd [#allocation7], 0
          %s175 = sshll.u32 %s1, 4
          %s176 = int_to_ptr.hbm [resolvable:$true] %s175
          %s177 = sshll.u32 [#allocation6], 4
          %s178 = int_to_ptr.vmem [resolvable:$true] %s177
          %183 = dma.hbm_to_vmem [thread:$0]  %s176, 2048, %s178, [#allocation7], 128, 128, 8
        $region16: #{tpu_custom_call.1} parent=11 // pred_fallthru
          _
        // Predicated region
        $region17: #{tpu_custom_call.1} parent=11 // pred_check
          %p184 = pneg %p87
        $region18: #{tpu_custom_call.1} parent=11 // pred_check_branch
          %186 = sbr.rel (%p184) target = $region20
        $region19: #{tpu_custom_call.1} parent=11 // pred_region
          %188 = vsyncadd [#allocation7], 0
          %s189 = sshll.u32 %s2, 4
          %s190 = int_to_ptr.hbm [resolvable:$true] %s189
          %s191 = sshll.u32 [#allocation8], 4
          %s192 = int_to_ptr.vmem [resolvable:$true] %s191
          %197 = dma.hbm_to_vmem [thread:$0]  %s190, 2048, %s192, [#allocation7], 128, 128, 8
        $region20: #{tpu_custom_call.1} parent=11 // pred_fallthru
          _
        // Predicated region
        $region21: #{tpu_custom_call.1} parent=11 // pred_check
          %p198 = pneg %p108
        $region22: #{tpu_custom_call.1} parent=11 // pred_check_branch
          %200 = sbr.rel (%p198) target = $region24
        $region23: #{tpu_custom_call.1} parent=11 // pred_region
          _
        $region24: #{tpu_custom_call.1} parent=11 // pred_fallthru
          _
        // Predicated region
        $region25: #{tpu_custom_call.1} parent=11 // pred_check
          %p201 = pneg %p129
        $region26: #{tpu_custom_call.1} parent=11 // pred_check_branch
          %203 = sbr.rel (%p201) target = $region28
        $region27: #{tpu_custom_call.1} parent=11 // pred_region
          _
        $region28: #{tpu_custom_call.1} parent=11 // pred_fallthru
          _
      $region12: #{tpu_custom_call.1} parent=5 // pred_fallthru
        _
      %p204 = scmp.lt.s32.totalorder %s19, 2
      // Predicated region
      $region29: #{tpu_custom_call.1} parent=5 // pred_check
        %p205 = pneg %p204
      $region30: #{tpu_custom_call.1} parent=5 // pred_check_branch
        %207 = sbr.rel (%p205) target = $region32
      $region31: #{tpu_custom_call.1} parent=5 // pred_region
        // Predicated region
        $region33: #{tpu_custom_call.1} parent=31 // pred_check
          %p208 = pneg %p39
        $region34: #{tpu_custom_call.1} parent=31 // pred_check_branch
          %210 = sbr.rel (%p208) target = $region36
        $region35: #{tpu_custom_call.1} parent=31 // pred_region
          %s211 = sand.u32 %s29, 1
          %s212 = scalar_lea.sflag [#allocation4], %s211
          %s213 = sand.u32 %s29, 1
          %s214 = smul.addr %s213, 64
          %s215 = scalar_lea.vmem [#allocation3], %s214
          %s216 = smul.u32 8, %s19
          %218 = vsyncadd %s212, 0
          %s219 = smul.addr %s216, 8
          %s220 = scalar_lea.hbm %s0, %s219
          %s221 = sshll.u32 %s220, 4
          %s222 = int_to_ptr.hbm [resolvable:$true] %s221
          %s223 = sshll.u32 %s215, 4
          %s224 = int_to_ptr.vmem [resolvable:$true] %s223
          %229 = dma.hbm_to_vmem [thread:$0]  %s222, 1024, %s224, %s212, 128, 128, 8
        $region36: #{tpu_custom_call.1} parent=31 // pred_fallthru
          _
      $region32: #{tpu_custom_call.1} parent=5 // pred_fallthru
        _
      %p230 = scmp.le.s32.totalorder 1, %s19
      %p231 = scmp.lt.s32.totalorder %s19, 3
      %p232 = pnand %p230, %p231
      %p233 = pneg %p232
      // Predicated region
      $region37: #{tpu_custom_call.1} parent=5 // pred_check
        _
      $region38: #{tpu_custom_call.1} parent=5 // pred_check_branch
        %235 = sbr.rel (%p232) target = $region40
      $region39: #{tpu_custom_call.1} parent=5 // pred_region
        %s236 = ssub.s32 %s19, 1
        %s237 = sand.u32 %s32, 1
        %s238 = scalar_lea.sflag [#allocation4], %s237
        %s239 = sand.u32 %s32, 1
        %s240 = smul.addr %s239, 64
        %s241 = scalar_lea.vmem [#allocation3], %s240
        // Predicated region
        $region41: #{tpu_custom_call.1} parent=39 // pred_check
          %p242 = pneg %p45
        $region42: #{tpu_custom_call.1} parent=39 // pred_check_branch
          %244 = sbr.rel (%p242) target = $region44
        $region43: #{tpu_custom_call.1} parent=39 // pred_region
          %246 = dma.done %s238, 1024
        $region44: #{tpu_custom_call.1} parent=39 // pred_fallthru
          _
        // Predicated region
        $region45: #{tpu_custom_call.1} parent=39 // pred_check
          %p247 = pneg %p66
        $region46: #{tpu_custom_call.1} parent=39 // pred_check_branch
          %249 = sbr.rel (%p247) target = $region48
        $region47: #{tpu_custom_call.1} parent=39 // pred_region
          %251 = dma.done [#allocation7], 2048
        $region48: #{tpu_custom_call.1} parent=39 // pred_fallthru
          _
        // Predicated region
        $region49: #{tpu_custom_call.1} parent=39 // pred_check
          %p252 = pneg %p87
        $region50: #{tpu_custom_call.1} parent=39 // pred_check_branch
          %254 = sbr.rel (%p252) target = $region52
        $region51: #{tpu_custom_call.1} parent=39 // pred_region
          %256 = dma.done [#allocation7], 2048
        $region52: #{tpu_custom_call.1} parent=39 // pred_fallthru
          _
        %s257 = sand.u32 %s32, 1
        %s258 = scalar_lea.sflag [#allocation4], %s257
        %s259 = sand.u32 %s32, 1
        %s260 = smul.addr %s259, 64
        %s261 = scalar_lea.vmem [#allocation3], %s260
        %p262 = pneg %p45
        %p263 = pneg %p42
        %p264 = pneg %p66
        %p265 = pneg %p63
        %p266 = pneg %p87
        %p267 = pneg %p84
        %p268 = pneg %p108
        %p269 = pneg %p105
        %p270 = pneg %p129
        %p271 = pneg %p126
        %p272 = pneg %p155
        %p273 = pneg %p152
        %s274 = sand.u32 %s142, 1
        %s275 = scalar_lea.sflag [#allocation5], %s274
        %s276 = sand.u32 %s142, 1
        %s277 = smul.addr %s276, 8
        %s278 = scalar_lea.vmem [#allocation9], %s277
        %s279 = smul.u32 8, %s24
        %v280 = vld [vmem:[%s241] sm:$0xff]
        %v281 = vld [vmem:[%s241 + $0x8] sm:$0xff]
        %v282 = vld [vmem:[%s241 + $0x10] sm:$0xff]
        %v283 = vld [vmem:[%s241 + $0x18] sm:$0xff]
        %v284 = vld [vmem:[%s241 + $0x20] sm:$0xff]
        %v285 = vld [vmem:[%s241 + $0x28] sm:$0xff]
        %v286 = vld [vmem:[%s241 + $0x30] sm:$0xff]
        %v287 = vld [vmem:[%s241 + $0x38] sm:$0xff]
        %v288 = vld [vmem:[#allocation6] sm:$0xff]
        %v289 = vld [vmem:[#allocation6 + $0x8] sm:$0xff]
        %v290 = vld [vmem:[#allocation6 + $0x10] sm:$0xff]
        %v291 = vld [vmem:[#allocation6 + $0x18] sm:$0xff]
        %v292 = vld [vmem:[#allocation6 + $0x20] sm:$0xff]
        %v293 = vld [vmem:[#allocation6 + $0x28] sm:$0xff]
        %v294 = vld [vmem:[#allocation6 + $0x30] sm:$0xff]
        %v295 = vld [vmem:[#allocation6 + $0x38] sm:$0xff]
        %v296 = vld [vmem:[#allocation6 + $0x40] sm:$0xff]
        %v297 = vld [vmem:[#allocation6 + $0x48] sm:$0xff]
        %v298 = vld [vmem:[#allocation6 + $0x50] sm:$0xff]
        %v299 = vld [vmem:[#allocation6 + $0x58] sm:$0xff]
        %v300 = vld [vmem:[#allocation6 + $0x60] sm:$0xff]
        %v301 = vld [vmem:[#allocation6 + $0x68] sm:$0xff]
        %v302 = vld [vmem:[#allocation6 + $0x70] sm:$0xff]
        %v303 = vld [vmem:[#allocation6 + $0x78] sm:$0xff]
        %304 = vmatpush.msra.mxu0 %v303
        %305 = vmatpush.msra.mxu0 %v302
        %306 = vmatpush.msra.mxu0 %v301
        %307 = vmatpush.msra.mxu0 %v300
        %308 = vmatpush.msra.mxu0 %v299
        %309 = vmatpush.msra.mxu0 %v298
        %310 = vmatpush.msra.mxu0 %v297
        %311 = vmatpush.msra.mxu0 %v296
        %312 = vmatpush.msra.mxu0 %v295
        %313 = vmatpush.msra.mxu0 %v294
        %314 = vmatpush.msra.mxu0 %v293
        %315 = vmatpush.msra.mxu0 %v292
        %316 = vmatpush.msra.mxu0 %v291
        %317 = vmatpush.msra.mxu0 %v290
        %318 = vmatpush.msra.mxu0 %v289
        %319 = vmatpush.msra.mxu0 %v288
        %320 = vmatmul.f32.gmra.mxu0 %v280
        %v321 = vpop.f32.mrf.mxu0
        %v322 = vadd.f32 0.0, %v321
        %323 = vmatmul.f32.gmra.mxu0 %v281
        %v324 = vpop.f32.mrf.mxu0
        %v325 = vadd.f32 0.0, %v324
        %326 = vmatmul.f32.gmra.mxu0 %v282
        %v327 = vpop.f32.mrf.mxu0
        %v328 = vadd.f32 0.0, %v327
        %329 = vmatmul.f32.gmra.mxu0 %v283
        %v330 = vpop.f32.mrf.mxu0
        %v331 = vadd.f32 0.0, %v330
        %332 = vmatmul.f32.gmra.mxu0 %v284
        %v333 = vpop.f32.mrf.mxu0
        %v334 = vadd.f32 0.0, %v333
        %335 = vmatmul.f32.gmra.mxu0 %v285
        %v336 = vpop.f32.mrf.mxu0
        %v337 = vadd.f32 0.0, %v336
        %338 = vmatmul.f32.gmra.mxu0 %v286
        %v339 = vpop.f32.mrf.mxu0
        %v340 = vadd.f32 0.0, %v339
        %341 = vmatmul.f32.gmra.mxu0 %v287
        %v342 = vpop.f32.mrf.mxu0
        %v343 = vadd.f32 0.0, %v342
        %344 = vdwg.mxu0
        %v345 = vtanh.pop %v322
        %v346 = vtanh.pop %v325
        %v347 = vtanh.pop %v328
        %v348 = vtanh.pop %v331
        %v349 = vtanh.pop %v334
        %v350 = vtanh.pop %v337
        %v351 = vtanh.pop %v340
        %v352 = vtanh.pop %v343
        %v353 = vld [vmem:[#allocation8] sm:$0xff]
        %v354 = vld [vmem:[#allocation8 + $0x8] sm:$0xff]
        %v355 = vld [vmem:[#allocation8 + $0x10] sm:$0xff]
        %v356 = vld [vmem:[#allocation8 + $0x18] sm:$0xff]
        %v357 = vld [vmem:[#allocation8 + $0x20] sm:$0xff]
        %v358 = vld [vmem:[#allocation8 + $0x28] sm:$0xff]
        %v359 = vld [vmem:[#allocation8 + $0x30] sm:$0xff]
        %v360 = vld [vmem:[#allocation8 + $0x38] sm:$0xff]
        %v361 = vld [vmem:[#allocation8 + $0x40] sm:$0xff]
        %v362 = vld [vmem:[#allocation8 + $0x48] sm:$0xff]
        %v363 = vld [vmem:[#allocation8 + $0x50] sm:$0xff]
        %v364 = vld [vmem:[#allocation8 + $0x58] sm:$0xff]
        %v365 = vld [vmem:[#allocation8 + $0x60] sm:$0xff]
        %v366 = vld [vmem:[#allocation8 + $0x68] sm:$0xff]
        %v367 = vld [vmem:[#allocation8 + $0x70] sm:$0xff]
        %v368 = vld [vmem:[#allocation8 + $0x78] sm:$0xff]
        %369 = vmatpush.msra.mxu0 %v368
        %370 = vmatpush.msra.mxu0 %v367
        %371 = vmatpush.msra.mxu0 %v366
        %372 = vmatpush.msra.mxu0 %v365
        %373 = vmatpush.msra.mxu0 %v364
        %374 = vmatpush.msra.mxu0 %v363
        %375 = vmatpush.msra.mxu0 %v362
        %376 = vmatpush.msra.mxu0 %v361
        %377 = vmatpush.msra.mxu0 %v360
        %378 = vmatpush.msra.mxu0 %v359
        %379 = vmatpush.msra.mxu0 %v358
        %380 = vmatpush.msra.mxu0 %v357
        %381 = vmatpush.msra.mxu0 %v356
        %382 = vmatpush.msra.mxu0 %v355
        %383 = vmatpush.msra.mxu0 %v354
        %384 = vmatpush.msra.mxu0 %v353
        %385 = vmatmul.f32.gmra.mxu0 %v345
        %v386 = vpop.f32.mrf.mxu0
        %v387 = vadd.f32 0.0, %v386
        %388 = vmatmul.f32.gmra.mxu0 %v346
        %v389 = vpop.f32.mrf.mxu0
        %v390 = vadd.f32 0.0, %v389
        %391 = vmatmul.f32.gmra.mxu0 %v347
        %v392 = vpop.f32.mrf.mxu0
        %v393 = vadd.f32 0.0, %v392
        %394 = vmatmul.f32.gmra.mxu0 %v348
        %v395 = vpop.f32.mrf.mxu0
        %v396 = vadd.f32 0.0, %v395
        %397 = vmatmul.f32.gmra.mxu0 %v349
        %v398 = vpop.f32.mrf.mxu0
        %v399 = vadd.f32 0.0, %v398
        %400 = vmatmul.f32.gmra.mxu0 %v350
        %v401 = vpop.f32.mrf.mxu0
        %v402 = vadd.f32 0.0, %v401
        %403 = vmatmul.f32.gmra.mxu0 %v351
        %v404 = vpop.f32.mrf.mxu0
        %v405 = vadd.f32 0.0, %v404
        %406 = vmatmul.f32.gmra.mxu0 %v352
        %v407 = vpop.f32.mrf.mxu0
        %v408 = vadd.f32 0.0, %v407
        %409 = vdwg.mxu0
        %410 = vmax.xlane.f32.xlu0 %v387
        %v411 = vpop.xlane.xlu0 %410
        %412 = vmax.xlane.f32.xlu0 %v390
        %v413 = vpop.xlane.xlu0 %412
        %414 = vmax.xlane.f32.xlu0 %v393
        %v415 = vpop.xlane.xlu0 %414
        %416 = vmax.xlane.f32.xlu0 %v396
        %v417 = vpop.xlane.xlu0 %416
        %418 = vmax.xlane.f32.xlu0 %v399
        %v419 = vpop.xlane.xlu0 %418
        %420 = vmax.xlane.f32.xlu0 %v402
        %v421 = vpop.xlane.xlu0 %420
        %422 = vmax.xlane.f32.xlu0 %v405
        %v423 = vpop.xlane.xlu0 %422
        %424 = vmax.xlane.f32.xlu0 %v408
        %v425 = vpop.xlane.xlu0 %424
        %v426 = vsub.f32 %v387, %v411
        %v427 = vsub.f32 %v390, %v413
        %v428 = vsub.f32 %v393, %v415
        %v429 = vsub.f32 %v396, %v417
        %v430 = vsub.f32 %v399, %v419
        %v431 = vsub.f32 %v402, %v421
        %v432 = vsub.f32 %v405, %v423
        %v433 = vsub.f32 %v408, %v425
        %v434 = vmul.f32 %v426, 1.442695
        %v435 = vpow.pop %v434
        %v436 = vmul.f32 %v427, 1.442695
        %v437 = vpow.pop %v436
        %v438 = vmul.f32 %v428, 1.442695
        %v439 = vpow.pop %v438
        %v440 = vmul.f32 %v429, 1.442695
        %v441 = vpow.pop %v440
        %v442 = vmul.f32 %v430, 1.442695
        %v443 = vpow.pop %v442
        %v444 = vmul.f32 %v431, 1.442695
        %v445 = vpow.pop %v444
        %v446 = vmul.f32 %v432, 1.442695
        %v447 = vpow.pop %v446
        %v448 = vmul.f32 %v433, 1.442695
        %v449 = vpow.pop %v448
        %v450 = vld [vmem:[%s3] sm:$0x1]
        %v452 = vperm.slane %v450, 0
        %v454 = vmul.f32 %v435, %v452
        %v455 = vmul.f32 %v437, %v452
        %v456 = vmul.f32 %v439, %v452
        %v457 = vmul.f32 %v441, %v452
        %v458 = vmul.f32 %v443, %v452
        %v459 = vmul.f32 %v445, %v452
        %v460 = vmul.f32 %v447, %v452
        %v461 = vmul.f32 %v449, %v452
        %462 = vadd.xlane.f32.xlu0 %v454
        %v463 = vpop.xlane.xlu0 %462
        %464 = vadd.xlane.f32.xlu0 %v455
        %v465 = vpop.xlane.xlu0 %464
        %466 = vadd.xlane.f32.xlu0 %v456
        %v467 = vpop.xlane.xlu0 %466
        %468 = vadd.xlane.f32.xlu0 %v457
        %v469 = vpop.xlane.xlu0 %468
        %470 = vadd.xlane.f32.xlu0 %v458
        %v471 = vpop.xlane.xlu0 %470
        %472 = vadd.xlane.f32.xlu0 %v459
        %v473 = vpop.xlane.xlu0 %472
        %474 = vadd.xlane.f32.xlu0 %v460
        %v475 = vpop.xlane.xlu0 %474
        %476 = vadd.xlane.f32.xlu0 %v461
        %v477 = vpop.xlane.xlu0 %476
        %478 = vadd.xlane.f32.xlu0 %v435
        %v479 = vpop.xlane.xlu0 %478
        %480 = vadd.xlane.f32.xlu0 %v437
        %v481 = vpop.xlane.xlu0 %480
        %482 = vadd.xlane.f32.xlu0 %v439
        %v483 = vpop.xlane.xlu0 %482
        %484 = vadd.xlane.f32.xlu0 %v441
        %v485 = vpop.xlane.xlu0 %484
        %486 = vadd.xlane.f32.xlu0 %v443
        %v487 = vpop.xlane.xlu0 %486
        %488 = vadd.xlane.f32.xlu0 %v445
        %v489 = vpop.xlane.xlu0 %488
        %490 = vadd.xlane.f32.xlu0 %v447
        %v491 = vpop.xlane.xlu0 %490
        %492 = vadd.xlane.f32.xlu0 %v449
        %v493 = vpop.xlane.xlu0 %492
        %v494 = vrcp.pop %v479
        %v495 = vmul.f32 %v479, %v494
        %v496 = vsub.f32 1.0, %v495
        %v497 = vmul.f32 %v494, %v496
        %v498 = vadd.f32 %v494, %v497
        %vm499 = vweird.f32 %v479
        %vm500 = vweird.f32 %v494
        %vm501 = vmor %vm499, %vm500
        %v502 = vsel %vm501, %v494, %v498
        %v503 = vand.u32 2147483647, %v479
        %vm504 = vcmp.eq.f32.partialorder %v503, 8.507059e+37
        %v505 = vand.u32 %v479, 2147483648
        %v506 = vor.u32 1.1754944e-38, %v505
        %v507 = vsel %vm504, %v506, %v502
        %v508 = vmul.f32 %v463, %v507
        %v509 = vrcp.pop %v481
        %v510 = vmul.f32 %v481, %v509
        %v511 = vsub.f32 1.0, %v510
        %v512 = vmul.f32 %v509, %v511
        %v513 = vadd.f32 %v509, %v512
        %vm514 = vweird.f32 %v481
        %vm515 = vweird.f32 %v509
        %vm516 = vmor %vm514, %vm515
        %v517 = vsel %vm516, %v509, %v513
        %v518 = vand.u32 2147483647, %v481
        %vm519 = vcmp.eq.f32.partialorder %v518, 8.507059e+37
        %v520 = vand.u32 %v481, 2147483648
        %v521 = vor.u32 1.1754944e-38, %v520
        %v522 = vsel %vm519, %v521, %v517
        %v523 = vmul.f32 %v465, %v522
        %v524 = vrcp.pop %v483
        %v525 = vmul.f32 %v483, %v524
        %v526 = vsub.f32 1.0, %v525
        %v527 = vmul.f32 %v524, %v526
        %v528 = vadd.f32 %v524, %v527
        %vm529 = vweird.f32 %v483
        %vm530 = vweird.f32 %v524
        %vm531 = vmor %vm529, %vm530
        %v532 = vsel %vm531, %v524, %v528
        %v533 = vand.u32 2147483647, %v483
        %vm534 = vcmp.eq.f32.partialorder %v533, 8.507059e+37
        %v535 = vand.u32 %v483, 2147483648
        %v536 = vor.u32 1.1754944e-38, %v535
        %v537 = vsel %vm534, %v536, %v532
        %v538 = vmul.f32 %v467, %v537
        %v539 = vrcp.pop %v485
        %v540 = vmul.f32 %v485, %v539
        %v541 = vsub.f32 1.0, %v540
        %v542 = vmul.f32 %v539, %v541
        %v543 = vadd.f32 %v539, %v542
        %vm544 = vweird.f32 %v485
        %vm545 = vweird.f32 %v539
        %vm546 = vmor %vm544, %vm545
        %v547 = vsel %vm546, %v539, %v543
        %v548 = vand.u32 2147483647, %v485
        %vm549 = vcmp.eq.f32.partialorder %v548, 8.507059e+37
        %v550 = vand.u32 %v485, 2147483648
        %v551 = vor.u32 1.1754944e-38, %v550
        %v552 = vsel %vm549, %v551, %v547
        %v553 = vmul.f32 %v469, %v552
        %v554 = vrcp.pop %v487
        %v555 = vmul.f32 %v487, %v554
        %v556 = vsub.f32 1.0, %v555
        %v557 = vmul.f32 %v554, %v556
        %v558 = vadd.f32 %v554, %v557
        %vm559 = vweird.f32 %v487
        %vm560 = vweird.f32 %v554
        %vm561 = vmor %vm559, %vm560
        %v562 = vsel %vm561, %v554, %v558
        %v563 = vand.u32 2147483647, %v487
        %vm564 = vcmp.eq.f32.partialorder %v563, 8.507059e+37
        %v565 = vand.u32 %v487, 2147483648
        %v566 = vor.u32 1.1754944e-38, %v565
        %v567 = vsel %vm564, %v566, %v562
        %v568 = vmul.f32 %v471, %v567
        %v569 = vrcp.pop %v489
        %v570 = vmul.f32 %v489, %v569
        %v571 = vsub.f32 1.0, %v570
        %v572 = vmul.f32 %v569, %v571
        %v573 = vadd.f32 %v569, %v572
        %vm574 = vweird.f32 %v489
        %vm575 = vweird.f32 %v569
        %vm576 = vmor %vm574, %vm575
        %v577 = vsel %vm576, %v569, %v573
        %v578 = vand.u32 2147483647, %v489
        %vm579 = vcmp.eq.f32.partialorder %v578, 8.507059e+37
        %v580 = vand.u32 %v489, 2147483648
        %v581 = vor.u32 1.1754944e-38, %v580
        %v582 = vsel %vm579, %v581, %v577
        %v583 = vmul.f32 %v473, %v582
        %v584 = vrcp.pop %v491
        %v585 = vmul.f32 %v491, %v584
        %v586 = vsub.f32 1.0, %v585
        %v587 = vmul.f32 %v584, %v586
        %v588 = vadd.f32 %v584, %v587
        %vm589 = vweird.f32 %v491
        %vm590 = vweird.f32 %v584
        %vm591 = vmor %vm589, %vm590
        %v592 = vsel %vm591, %v584, %v588
        %v593 = vand.u32 2147483647, %v491
        %vm594 = vcmp.eq.f32.partialorder %v593, 8.507059e+37
        %v595 = vand.u32 %v491, 2147483648
        %v596 = vor.u32 1.1754944e-38, %v595
        %v597 = vsel %vm594, %v596, %v592
        %v598 = vmul.f32 %v475, %v597
        %v599 = vrcp.pop %v493
        %v600 = vmul.f32 %v493, %v599
        %v601 = vsub.f32 1.0, %v600
        %v602 = vmul.f32 %v599, %v601
        %v603 = vadd.f32 %v599, %v602
        %vm604 = vweird.f32 %v493
        %vm605 = vweird.f32 %v599
        %vm606 = vmor %vm604, %vm605
        %v607 = vsel %vm606, %v599, %v603
        %v608 = vand.u32 2147483647, %v493
        %vm609 = vcmp.eq.f32.partialorder %v608, 8.507059e+37
        %v610 = vand.u32 %v493, 2147483648
        %v611 = vor.u32 1.1754944e-38, %v610
        %v612 = vsel %vm609, %v611, %v607
        %v613 = vmul.f32 %v477, %v612
        %v614 = vmul.f32 %v508, %v280
        %v615 = vmul.f32 %v523, %v281
        %v616 = vmul.f32 %v538, %v282
        %v617 = vmul.f32 %v553, %v283
        %v618 = vmul.f32 %v568, %v284
        %v619 = vmul.f32 %v583, %v285
        %v620 = vmul.f32 %v598, %v286
        %v621 = vmul.f32 %v613, %v287
        %v622 = vrot.slane %v614, 4
        %v623 = vadd.f32 %v614, %v622
        %v624 = vrot.slane %v623, 2
        %v625 = vadd.f32 %v623, %v624
        %v626 = vrot.slane %v625, 1
        %v627 = vadd.f32 %v625, %v626
        %v628 = vrot.slane %v615, 4
        %v629 = vadd.f32 %v615, %v628
        %v630 = vrot.slane %v629, 2
        %v631 = vadd.f32 %v629, %v630
        %v632 = vrot.slane %v631, 1
        %v633 = vadd.f32 %v631, %v632
        %v634 = vrot.slane %v616, 4
        %v635 = vadd.f32 %v616, %v634
        %v636 = vrot.slane %v635, 2
        %v637 = vadd.f32 %v635, %v636
        %v638 = vrot.slane %v637, 1
        %v639 = vadd.f32 %v637, %v638
        %v640 = vrot.slane %v617, 4
        %v641 = vadd.f32 %v617, %v640
        %v642 = vrot.slane %v641, 2
        %v643 = vadd.f32 %v641, %v642
        %v644 = vrot.slane %v643, 1
        %v645 = vadd.f32 %v643, %v644
        %v646 = vrot.slane %v618, 4
        %v647 = vadd.f32 %v618, %v646
        %v648 = vrot.slane %v647, 2
        %v649 = vadd.f32 %v647, %v648
        %v650 = vrot.slane %v649, 1
        %v651 = vadd.f32 %v649, %v650
        %v652 = vrot.slane %v619, 4
        %v653 = vadd.f32 %v619, %v652
        %v654 = vrot.slane %v653, 2
        %v655 = vadd.f32 %v653, %v654
        %v656 = vrot.slane %v655, 1
        %v657 = vadd.f32 %v655, %v656
        %v658 = vrot.slane %v620, 4
        %v659 = vadd.f32 %v620, %v658
        %v660 = vrot.slane %v659, 2
        %v661 = vadd.f32 %v659, %v660
        %v662 = vrot.slane %v661, 1
        %v663 = vadd.f32 %v661, %v662
        %v664 = vrot.slane %v621, 4
        %v665 = vadd.f32 %v621, %v664
        %v666 = vrot.slane %v665, 2
        %v667 = vadd.f32 %v665, %v666
        %v668 = vrot.slane %v667, 1
        %v669 = vadd.f32 %v667, %v668
        %s670 = sld [smem:[#allocation2]]
        %v671 = vstv %s670
        %v672 = vadd.f32 %v627, %v671
        %v673 = vadd.f32 %v633, %v671
        %v674 = vadd.f32 %v639, %v671
        %v675 = vadd.f32 %v645, %v671
        %v676 = vadd.f32 %v651, %v671
        %v677 = vadd.f32 %v657, %v671
        %v678 = vadd.f32 %v663, %v671
        %v679 = vadd.f32 %v669, %v671
        %vm680 = vcmp.ge.f32.partialorder %v672, 0.0
        %vm681 = vcmp.ge.f32.partialorder %v673, 0.0
        %vm682 = vcmp.ge.f32.partialorder %v674, 0.0
        %vm683 = vcmp.ge.f32.partialorder %v675, 0.0
        %vm684 = vcmp.ge.f32.partialorder %v676, 0.0
        %vm685 = vcmp.ge.f32.partialorder %v677, 0.0
        %vm686 = vcmp.ge.f32.partialorder %v678, 0.0
        %vm687 = vcmp.ge.f32.partialorder %v679, 0.0
        %v688 = vmul.f32 %v672, 0.01
        %v689 = vmul.f32 %v673, 0.01
        %v690 = vmul.f32 %v674, 0.01
        %v691 = vmul.f32 %v675, 0.01
        %v692 = vmul.f32 %v676, 0.01
        %v693 = vmul.f32 %v677, 0.01
        %v694 = vmul.f32 %v678, 0.01
        %v695 = vmul.f32 %v679, 0.01
        %v696 = vsel %vm680, %v672, %v688
        %v697 = vsel %vm681, %v673, %v689
        %v698 = vsel %vm682, %v674, %v690
        %v699 = vsel %vm683, %v675, %v691
        %v700 = vsel %vm684, %v676, %v692
        %v701 = vsel %vm685, %v677, %v693
        %v702 = vsel %vm686, %v678, %v694
        %v703 = vsel %vm687, %v679, %v695
        %vm712 = vcmask 1041409
        %v713 = vsel %vm712, %v697, %v696
        %vm714 = vcmask 1042434
        %v715 = vsel %vm714, %v698, %v713
        %vm716 = vcmask 1043459
        %v717 = vsel %vm716, %v699, %v715
        %vm718 = vcmask 1044484
        %v719 = vsel %vm718, %v700, %v717
        %vm720 = vcmask 1045509
        %v721 = vsel %vm720, %v701, %v719
        %vm722 = vcmask 1046534
        %v723 = vsel %vm722, %v702, %v721
        %vm724 = vcmask 1047559
        %v725 = vsel %vm724, %v703, %v723
        %727 = vst [vmem:[%s278] sm:$0xff] %v725
        %s728 = sand.u32 %s142, 1
        %s729 = scalar_lea.sflag [#allocation5], %s728
        %s730 = sand.u32 %s142, 1
        %s731 = smul.addr %s730, 8
        %s732 = scalar_lea.vmem [#allocation9], %s731
        // Predicated region
        $region53: #{tpu_custom_call.1} parent=39 // pred_check
          %p733 = pneg %p152
        $region54: #{tpu_custom_call.1} parent=39 // pred_check_branch
          %735 = sbr.rel (%p733) target = $region56
        $region55: #{tpu_custom_call.1} parent=39 // pred_region
          %737 = vsyncadd %s729, 0
          %s738 = smul.addr %s24, 8
          %s739 = scalar_lea.hbm %s5, %s738
          %s741 = sshll.u32 %s732, 4
          %s742 = int_to_ptr.vmem [resolvable:$true] %s741
          %s743 = sshll.u32 %s739, 4
          %s744 = int_to_ptr.hbm [resolvable:$true] %s743
          %746 = dma.vmem_to_hbm [thread:$0]  %s742, 128, %s744, %s729
        $region56: #{tpu_custom_call.1} parent=39 // pred_fallthru
          _
      $region40: #{tpu_custom_call.1} parent=5 // pred_fallthru
        _
      %p747 = scmp.le.s32.totalorder 2, %s19
      // Predicated region
      $region57: #{tpu_custom_call.1} parent=5 // pred_check
        %p748 = pneg %p747
      $region58: #{tpu_custom_call.1} parent=5 // pred_check_branch
        %750 = sbr.rel (%p748) target = $region60
      $region59: #{tpu_custom_call.1} parent=5 // pred_region
        %s751 = ssub.s32 %s19, 2
        // Predicated region
        $region61: #{tpu_custom_call.1} parent=59 // pred_check
          %p752 = pneg %p158
        $region62: #{tpu_custom_call.1} parent=59 // pred_check_branch
          %754 = sbr.rel (%p752) target = $region64
        $region63: #{tpu_custom_call.1} parent=59 // pred_region
          %s755 = sand.u32 %s143, 1
          %s756 = scalar_lea.sflag [#allocation5], %s755
          %s757 = sand.u32 %s143, 1
          %s758 = smul.addr %s757, 8
          %s759 = scalar_lea.vmem [#allocation9], %s758
          %761 = dma.done %s756, 128
        $region64: #{tpu_custom_call.1} parent=59 // pred_fallthru
          _
      $region60: #{tpu_custom_call.1} parent=5 // pred_fallthru
        _
    $region6: #{tpu_custom_call.1} parent=1 // loop_footer
      %s23 = sadd.s32 1, %s19
    $region7: #{tpu_custom_call.1} parent=1 // loop_footer_branch
      %18 = sbr.rel target = $region3
    $region8: #{tpu_custom_call.1} parent=1 // loop_exit
      _
    %762 = vsyncpa [#allocation4], 1
    %s763 = scalar_lea.sflag [#allocation4], 1
    %764 = vsyncpa %s763, 1
    %765 = vsyncpa [#allocation7], 1
    %766 = vsyncpa [#allocation5], 1
    %s767 = scalar_lea.sflag [#allocation5], 1
    %768 = vsyncpa %s767, 1

</llo_original>
